<compile_context>
chip_gen: v7x
topology: tpu7x:2x2x1
jax: 0.10.0
libtpu: 0.0.40
codegen_flags: <defaults>
</compile_context>

<pallas_src>
import functools

import jax
import jax.numpy as jnp
from jax.experimental import pallas as pl
from jax.experimental.pallas import tpu as pltpu


# ---------------------------------------------------------------------------
# Per-generation VMEM budgeting (v5e/v6e: 128 MiB, v7x: 64 MiB per TensorCore)
# ---------------------------------------------------------------------------
def _vmem_budgets():
    try:
        phys = pltpu.get_tpu_info().vmem_capacity_bytes
    except Exception:
        phys = 64 << 20  # conservative fallback (v7x-sized)
    limit_cap = int(phys * 3 // 4)   # never request the full physical VMEM (headroom)
    tile_budget = int(phys // 2)     # working-set budget used for tile sizing
    return limit_cap, tile_budget


# ---------------------------------------------------------------------------
# Pass 1: tiled abs-max over W.  Grid = (D tiles ["parallel"], N tiles ["arbitrary"]).
# Emits sublane/lane-dense (8, d_tile) running maxima; final max is done in XLA.
# ---------------------------------------------------------------------------
def _absmax_kernel(w_ref, o_ref):
    i = pl.program_id(1)                               # N-tile index (reduction axis, last)
    absw = jnp.abs(w_ref[...])                         # (n_tile, d_tile) f32
    n_tile, d_tile = absw.shape
    part = jnp.max(absw.reshape(n_tile // 8, 8, d_tile), axis=0)   # (8, d_tile)

    @pl.when(i == 0)
    def _():
        o_ref[...] = part

    @pl.when(i > 0)
    def _():
        o_ref[...] = jnp.maximum(o_ref[...], part)


def _pick_pass1_tiles(np_rows, d, tile_budget):
    d_tile = next((c for c in (1024, 512, 256, 128) if d % c == 0), d)
    n_tile = 8
    for c in (8192, 4096, 2048, 1024, 512, 256, 128, 64, 32, 16, 8):
        if np_rows % c == 0 and 2 * c * d_tile * 4 <= tile_budget:
            n_tile = c
            break
    return n_tile, d_tile


# ---------------------------------------------------------------------------
# Pass 2: scalar-prefetched row gather + DoReFa quantize + bag-sum.
# Weight stays in HBM; each bag's L row slices are DMA'd into a double-buffered
# VMEM scratch (prefetch bag b+1 while computing bag b), all math in f32.
# ---------------------------------------------------------------------------
def _gather_bag_kernel(idx_ref, inv_ref, w_hbm, o_ref, rowbuf, sem, *,
                       bitwidth, bags_per_tile, bag_len, d_tile, quantize):
    bi = pl.program_id(0)                 # bag-tile index
    j = pl.program_id(1)                  # embedding-dim tile index
    col0 = j * d_tile
    if d_tile % 128 == 0:
        col0 = pl.multiple_of(col0, 128)

    if quantize:
        inv = inv_ref[0, 0]               # hoisted 1/(2*scale); SMEM read before any wait
        levels = float(2 ** bitwidth - 1)

    def issue(b_local, slot):
        base = (bi * bags_per_tile + b_local) * bag_len
        for l in range(bag_len):
            row = idx_ref[base + l]                       # SMEM scalar read
            pltpu.make_async_copy(
                w_hbm.at[pl.ds(row, 1), pl.ds(col0, d_tile)],
                rowbuf.at[slot, pl.ds(l, 1)],
                sem.at[slot],
            ).start()

    def drain(slot):
        for l in range(bag_len):
            pltpu.make_async_copy(
                w_hbm.at[pl.ds(0, 1), pl.ds(0, d_tile)],  # shape-matched dummy src
                rowbuf.at[slot, pl.ds(l, 1)],
                sem.at[slot],
            ).wait()

    issue(0, 0)
    for b_local in range(bags_per_tile):                  # static -> fully unrolled
        slot = b_local & 1
        if b_local + 1 < bags_per_tile:
            issue(b_local + 1, 1 - slot)                  # overlap next bag's DMAs
        drain(slot)
        rows = rowbuf[slot]                                # (bag_len, d_tile) f32
        if quantize:
            t = jnp.tanh(rows)                             # EUP
            rows = 2.0 * (jnp.round(levels * (t * inv + 0.5)) * (1.0 / levels)) - 1.0
        o_ref[pl.ds(b_local, 1), :] = jnp.sum(rows, axis=0, keepdims=True)


def _pick_pass2_tiles(bp, d, bag_len, tile_budget):
    bags_per_tile = next(c for c in (64, 32, 16, 8) if bp % c == 0)
    cands = [d] + [c for c in (2048, 1024, 512, 256, 128) if d % c == 0 and c < d]
    d_tile = d
    for c in cands:
        if c != d and c % 128 != 0:
            continue
        if (2 * bag_len * c + 2 * bags_per_tile * c) * 4 <= tile_budget:
            d_tile = c
            break
    return bags_per_tile, d_tile


# ---------------------------------------------------------------------------
# Wrapper
# ---------------------------------------------------------------------------
def quant_embedding_bag_pact(indices, weight, *, bitwidth=8,
                             full_precision_flag=False, max_abs_weight=None):
    """Forward of QuantEmbeddingBagPACT (2-D int input, offsets=None, mode='sum').

    max_abs_weight: optional precomputed max|W| (frozen-weight inference can cache it
    once per checkpoint and skip the full-table scan on every call).
    """
    N, D = weight.shape
    B, L = indices.shape
    limit_cap, tile_budget = _vmem_budgets()

    # ----- pass 1: abs-max over W (skipped in full-precision mode / when cached) -----
    if full_precision_flag:
        inv_2s = jnp.ones((1, 1), jnp.float32)            # unused by the FP kernel
    else:
        if max_abs_weight is None:
            Np = ((N + 7) // 8) * 8
            w1 = weight if Np == N else jnp.pad(weight, ((0, Np - N), (0, 0)))
            n_tile, d_tile1 = _pick_pass1_tiles(Np, D, tile_budget)
            vmem1 = int(min(max(4 * (2 * n_tile * d_tile1 + 4 * 8 * d_tile1) + (1 << 20),
                                16 << 20), limit_cap))
            partial = pl.pallas_call(
                _absmax_kernel,
                out_shape=jax.ShapeDtypeStruct((8, D), jnp.float32),
                grid=(D // d_tile1, Np // n_tile),
                in_specs=[pl.BlockSpec((n_tile, d_tile1), lambda j, i: (i, j))],
                out_specs=pl.BlockSpec((8, d_tile1), lambda j, i: (0, j)),
                compiler_params=pltpu.CompilerParams(
                    dimension_semantics=("parallel", "arbitrary"),
                    vmem_limit_bytes=vmem1),
            )(w1)
            max_abs_weight = jnp.max(partial)
        # max|tanh(W)| == tanh(max|W|) (tanh odd & monotone) -> one scalar transcendental.
        inv_2s = (0.5 / jnp.tanh(max_abs_weight)).reshape(1, 1).astype(jnp.float32)

    # ----- pass 2: row gather + quantize + bag-sum -----
    Bp = ((B + 7) // 8) * 8
    bags_per_tile, d_tile = _pick_pass2_tiles(Bp, D, L, tile_budget)
    idx_flat = jnp.pad(indices.astype(jnp.int32).reshape(B * L),
                       (0, (Bp - B) * L))                 # padded bags gather row 0, discarded

    kernel = functools.partial(
        _gather_bag_kernel, bitwidth=bitwidth, bags_per_tile=bags_per_tile,
        bag_len=L, d_tile=d_tile, quantize=not full_precision_flag)

    vmem2 = int(min(max(4 * (2 * L * d_tile + 2 * bags_per_tile * d_tile) + (4 << 20),
                        16 << 20), limit_cap))
    out = pl.pallas_call(
        kernel,
        out_shape=jax.ShapeDtypeStruct((Bp, D), jnp.float32),
        grid_spec=pltpu.PrefetchScalarGridSpec(
            num_scalar_prefetch=1,                                   # bag indices -> SMEM
            grid=(Bp // bags_per_tile, D // d_tile),
            in_specs=[
                pl.BlockSpec(memory_space=pltpu.MemorySpace.SMEM),   # 1/(2*scale) scalar
                pl.BlockSpec(memory_space=pl.ANY),                   # W stays in HBM
            ],
            out_specs=pl.BlockSpec((bags_per_tile, d_tile),
                                   lambda bi, j, idx: (bi, j)),
            scratch_shapes=[
                pltpu.VMEM((2, L, d_tile), jnp.float32),             # double-buffered rows
                pltpu.SemaphoreType.DMA((2,)),
            ]),
        compiler_params=pltpu.CompilerParams(
            dimension_semantics=("parallel", "parallel"),
            vmem_limit_bytes=vmem2),
    )(idx_flat, inv_2s, weight)
    return out[:B]


# ---------------------------------------------------------------------------
# Pure-JAX reference (matches the PyTorch forward)
# ---------------------------------------------------------------------------
def _ref_forward(indices, weight, bitwidth=8, full_precision_flag=False):
    if not full_precision_flag:
        t = jnp.tanh(weight)
        s = jnp.max(jnp.abs(t))
        levels = 2 ** bitwidth - 1
        vhat = 2.0 * (jnp.round(levels * (t / (2.0 * s) + 0.5)) / levels) - 1.0
    else:
        vhat = weight
    return jnp.sum(vhat[indices], axis=1)


if __name__ == "__main__":
    # Deterministic synthetic parameters (module __init__: uniform(+-sqrt(1/N), (N, D))).
    N, D = 32, 128          # num_embeddings, embedding_dim
    B, L = 4, 8             # bags, indices per bag (2-D input, offsets=None)
    key = jax.random.PRNGKey(0)
    kw, ki = jax.random.split(key)
    bound = (1.0 / N) ** 0.5
    W = jax.random.uniform(kw, (N, D), jnp.float32, minval=-bound, maxval=bound)
    idx = jax.random.randint(ki, (B, L), 0, N, dtype=jnp.int32)

    # Quantized path (pass 1 abs-max scan + pass 2 gather)
    out_q = jax.block_until_ready(
        quant_embedding_bag_pact(idx, W, bitwidth=8, full_precision_flag=False))
    ref_q = _ref_forward(idx, W, bitwidth=8, full_precision_flag=False)
    assert out_q.shape == (B, D)
    assert jnp.allclose(out_q, ref_q, atol=5e-2), float(jnp.max(jnp.abs(out_q - ref_q)))

    # Cached-scale path (frozen weights: pass 1 skipped entirely)
    out_c = jax.block_until_ready(
        quant_embedding_bag_pact(idx, W, bitwidth=8, full_precision_flag=False,
                                 max_abs_weight=jnp.max(jnp.abs(W))))
    assert jnp.allclose(out_c, ref_q, atol=5e-2), float(jnp.max(jnp.abs(out_c - ref_q)))

    # Full-precision path (no scale pass, plain gather + sum)
    out_fp = jax.block_until_ready(
        quant_embedding_bag_pact(idx, W, full_precision_flag=True))
    ref_fp = _ref_forward(idx, W, full_precision_flag=True)
    assert out_fp.shape == (B, D)
    assert jnp.allclose(out_fp, ref_fp, atol=1e-5), float(jnp.max(jnp.abs(out_fp - ref_fp)))

    print("KERNEL_OK")
</pallas_src>

<mosaic_0001>
module attributes {stable_mosaic.version = 11 : i64} {
  func.func @_absmax_kernel(%arg0: i32, %arg1: i32, %arg2: memref<32x128xf32, #tpu.memory_space<vmem>>, %arg3: memref<8x128xf32, #tpu.memory_space<vmem>>) attributes {dimension_semantics = [#tpu.dimension_semantics<parallel>, #tpu.dimension_semantics<arbitrary>], iteration_bounds = array<i64: 1, 1>, scalar_prefetch = 0 : i64, scratch_operands = 0 : i64, tpu.core_type = #tpu.core_type<tc>, window_params = [{transform_indices = @transform_0, window_bounds = array<i64: 32, 128>}, {transform_indices = @transform_1, window_bounds = array<i64: 8, 128>}]} {
    %c0 = arith.constant 0 : index
    %c0_0 = arith.constant 0 : index
    %0 = vector.load %arg2[%c0, %c0_0] : memref<32x128xf32, #tpu.memory_space<vmem>>, vector<32x128xf32>
    %1 = math.absf %0 : vector<32x128xf32>
    %2 = vector.shape_cast %1 : vector<32x128xf32> to vector<4x8x128xf32>
    %cst = arith.constant dense<0xFF800000> : vector<8x128xf32>
    %3 = vector.multi_reduction <maximumf>, %2, %cst [0] : vector<4x8x128xf32> to vector<8x128xf32>
    %c0_i32 = arith.constant 0 : i32
    %4 = arith.cmpi eq, %arg1, %c0_i32 : i32
    %5 = arith.extui %4 : i1 to i32
    %c0_i32_1 = arith.constant 0 : i32
    %6 = arith.cmpi ne, %5, %c0_i32_1 : i32
    scf.if %6 {
      %c0_4 = arith.constant 0 : index
      %c0_5 = arith.constant 0 : index
      %10 = vector.load %arg3[%c0_4, %c0_5] : memref<8x128xf32, #tpu.memory_space<vmem>>, vector<8x128xf32>
      tpu.vector_store %arg3[%c0_4, %c0_5], %3 {strides = array<i32>} : memref<8x128xf32, #tpu.memory_space<vmem>>, vector<8x128xf32>,
    } else {
    }
    %c0_i32_2 = arith.constant 0 : i32
    %7 = arith.cmpi sgt, %arg1, %c0_i32_2 : i32
    %8 = arith.extui %7 : i1 to i32
    %c0_i32_3 = arith.constant 0 : i32
    %9 = arith.cmpi ne, %8, %c0_i32_3 : i32
    scf.if %9 {
      %c0_4 = arith.constant 0 : index
      %c0_5 = arith.constant 0 : index
      %10 = vector.load %arg3[%c0_4, %c0_5] : memref<8x128xf32, #tpu.memory_space<vmem>>, vector<8x128xf32>
      %11 = arith.maximumf %10, %3 : vector<8x128xf32>
      %c0_6 = arith.constant 0 : index
      %c0_7 = arith.constant 0 : index
      %12 = vector.load %arg3[%c0_6, %c0_7] : memref<8x128xf32, #tpu.memory_space<vmem>>, vector<8x128xf32>
      tpu.vector_store %arg3[%c0_6, %c0_7], %11 {strides = array<i32>} : memref<8x128xf32, #tpu.memory_space<vmem>>, vector<8x128xf32>,
    } else {
    }
    return
  }
  func.func @transform_0(%arg0: i32, %arg1: i32) -> (i32, i32) {
    %c0_i32 = arith.constant 0 : i32
    return %arg1, %arg0 : i32, i32
  }
  func.func @transform_1(%arg0: i32, %arg1: i32) -> (i32, i32) {
    %c0_i32 = arith.constant 0 : i32
    %c0_i32_0 = arith.constant 0 : i32
    return %c0_i32, %arg0 : i32, i32
  }
}

</mosaic_0001>

<llo_original>
// kernel: tpu_custom_call.1
$region0: #{tpu_custom_call.1}
  #allocation0 [shape = 'u32[]', space=smem, size = 0x4, offset = 0x4, fixed_abs, tag = 'smem constant byte address 0x4 - core index']
  #allocation1 [shape = 'u32[144,128]{1,0:T(1,128)}', space=vmem, size = 0x12000, scoped, tag = 'internal scratch']
  %s0 = inlined_call_operand.hbm [shape: f32[32,128], index: 0, kind: input, shape index: {}]
  %s1 = inlined_call_operand.hbm [shape: f32[8,128], index: 1, kind: output, shape index: {}]
  %s2 = sld [smem:[#allocation0]]
  $region26: #{tpu_custom_call.1} parent=0
    _
  %s4 = ssub.s32 1, %s2
  %s5 = scalar_select 0, %s4, %s2
  $region1: #{tpu_custom_call.1} parent=0
    #allocation2 [shape = 'u8[16384]{0}', space=vmem, size = 0x4000, scoped, tag = 'input window, operand 0, single buffered']
    #allocation3 [shape = 's32[1]{0}', space=sflag, size = 0x4, scoped, tag = 'scoped memory for tpu_custom_call.1']
    #allocation4 [shape = 's32[1]{0}', space=sflag, size = 0x4, scoped, tag = 'scoped memory for tpu_custom_call.1']
    #allocation5 [shape = 'u8[4096]{0}', space=vmem, size = 0x1000, scoped, tag = 'output window, operand 0, single buffered']
    %6 = vsyncpa [#allocation3], 0
    %7 = vsyncpa [#allocation4], 0
    // Predicated region
    $region2: #{tpu_custom_call.1} parent=1 // pred_check
      _
    $region3: #{tpu_custom_call.1} parent=1 // pred_check_branch
      %9 = sbr.rel (0) target = $region5
    $region4: #{tpu_custom_call.1} parent=1 // pred_region
      %s11 = ssub.s32 512, 512
      %12 = vsyncadd [#allocation3], %s11
      %s13 = sshll.u32 [#allocation2], 4
      %s14 = int_to_ptr.vmem [resolvable:$true] %s13
      %19 = dma.hbm_to_vmem [thread:$0]  %s0, 512, %s14, [#allocation3], 128, 128, 8
    $region5: #{tpu_custom_call.1} parent=1 // pred_fallthru
      _
    // Predicated region
    $region6: #{tpu_custom_call.1} parent=1 // pred_check
      _
    $region7: #{tpu_custom_call.1} parent=1 // pred_check_branch
      %21 = sbr.rel (0) target = $region9
    $region8: #{tpu_custom_call.1} parent=1 // pred_region
      %22 = dma.done [#allocation3], 512
    $region9: #{tpu_custom_call.1} parent=1 // pred_fallthru
      _
    %v23 = vld [vmem:[#allocation2] sm:$0xff]
    %v24 = vld [vmem:[#allocation2 + $0x8] sm:$0xff]
    %v25 = vld [vmem:[#allocation2 + $0x10] sm:$0xff]
    %v26 = vld [vmem:[#allocation2 + $0x18] sm:$0xff]
    %v27 = vand.u32 2147483647, %v23
    %v28 = vand.u32 2147483647, %v24
    %v29 = vand.u32 2147483647, %v25
    %v30 = vand.u32 2147483647, %v26
    %v31 = vmax.f32 %v27, %v28
    %v32 = vmax.f32 %v29, %v30
    %v33 = vmax.f32 %v31, %v32
    %p34 = scmp.eq.s32.totalorder 0, 0
    // Predicated region
    $region10: #{tpu_custom_call.1} parent=1 // pred_check
      %p35 = pneg %p34
    $region11: #{tpu_custom_call.1} parent=1 // pred_check_branch
      %37 = sbr.rel (%p35) target = $region13
    $region12: #{tpu_custom_call.1} parent=1 // pred_region
      %38 = vst [vmem:[#allocation5] sm:$0xff] %v33
    $region13: #{tpu_custom_call.1} parent=1 // pred_fallthru
      _
    %p39 = scmp.gt.s32.totalorder 0, 0
    // Predicated region
    $region14: #{tpu_custom_call.1} parent=1 // pred_check
      %p40 = pneg %p39
    $region15: #{tpu_custom_call.1} parent=1 // pred_check_branch
      %42 = sbr.rel (%p40) target = $region17
    $region16: #{tpu_custom_call.1} parent=1 // pred_region
      %v43 = vld [vmem:[#allocation5] sm:$0xff]
      %v44 = vmax.f32 %v43, %v33
      %45 = vst [vmem:[#allocation5] sm:$0xff] %v44
    $region17: #{tpu_custom_call.1} parent=1 // pred_fallthru
      _
    // Predicated region
    $region18: #{tpu_custom_call.1} parent=1 // pred_check
      _
    $region19: #{tpu_custom_call.1} parent=1 // pred_check_branch
      %47 = sbr.rel (0) target = $region21
    $region20: #{tpu_custom_call.1} parent=1 // pred_region
      %s49 = ssub.s32 128, 128
      %50 = vsyncadd [#allocation4], %s49
      %s52 = sshll.u32 [#allocation5], 4
      %s53 = int_to_ptr.vmem [resolvable:$true] %s52
      %55 = dma.vmem_to_hbm [thread:$0]  %s53, 128, %s1, [#allocation4]
    $region21: #{tpu_custom_call.1} parent=1 // pred_fallthru
      _
    // Predicated region
    $region22: #{tpu_custom_call.1} parent=1 // pred_check
      _
    $region23: #{tpu_custom_call.1} parent=1 // pred_check_branch
      %57 = sbr.rel (0) target = $region25
    $region24: #{tpu_custom_call.1} parent=1 // pred_region
      %58 = dma.done [#allocation4], 128
    $region25: #{tpu_custom_call.1} parent=1 // pred_fallthru
      _
    %59 = vsyncpa [#allocation3], 1
    %60 = vsyncpa [#allocation4], 1

</llo_original>
